<compile_context>
chip_gen: v7x
topology: tpu7x:2x2x1
jax: 0.10.0
libtpu: 0.0.40
codegen_flags: <defaults>
</compile_context>

<pallas_src>
import math

import jax
import jax.numpy as jnp
from jax import lax
from jax.experimental import pallas as pl
from jax.experimental.pallas import tpu as pltpu


# ---------------------------------------------------------------------------
# helpers
# ---------------------------------------------------------------------------
def _round_up(x, m):
    return ((x + m - 1) // m) * m


def _pick_tm(m_pad, sublane, cap=512, min_blocks=1):
    """Pick a row tile <= cap, preferring divisors of m_pad (no extra pad)."""
    if m_pad <= cap:
        tm = m_pad
        if min_blocks >= 2 and m_pad >= 2 * sublane:
            # split so both v7x TensorCores get work (free when the weight is
            # resident -- it is only DMA'd once regardless of #row blocks)
            tm = _round_up((m_pad + 1) // 2, sublane)
    else:
        tm = None
        cand = cap
        while cand >= sublane:
            if m_pad % cand == 0:
                tm = cand
                break
            cand -= sublane
        if tm is None or tm < 128:
            tm = cap  # accept a little padding rather than starving the MXU
    m_pad = _round_up(m_pad, tm)
    return tm, m_pad


# ---------------------------------------------------------------------------
# kernels
# ---------------------------------------------------------------------------
def _resident_kernel(x_ref, w_ref, b_ref, o_ref):
    # x_ref: (tm, K)   w_ref: (K, N) resident   b_ref: (1, N)   o_ref: (tm, N)
    acc = jnp.dot(x_ref[...], w_ref[...], preferred_element_type=jnp.float32)
    o_ref[...] = (acc + b_ref[...].astype(jnp.float32)).astype(o_ref.dtype)


def _tiled_kernel_inplace(x_ref, w_ref, b_ref, o_ref):
    # f32 output: accumulate directly into o_ref (no extra VMEM scratch).
    k = pl.program_id(2)

    @pl.when(k == 0)
    def _():
        o_ref[...] = jnp.broadcast_to(b_ref[...], o_ref.shape).astype(o_ref.dtype)

    o_ref[...] += jnp.dot(x_ref[...], w_ref[...],
                          preferred_element_type=jnp.float32)


def _tiled_kernel_scratch(x_ref, w_ref, b_ref, o_ref, acc_ref):
    # non-f32 output: f32 accumulator scratch, bias folded into init.
    k = pl.program_id(2)

    @pl.when(k == 0)
    def _():
        acc_ref[...] = jnp.broadcast_to(b_ref[...].astype(jnp.float32),
                                        acc_ref.shape)

    acc_ref[...] += jnp.dot(x_ref[...], w_ref[...],
                            preferred_element_type=jnp.float32)

    @pl.when(k == pl.num_programs(2) - 1)
    def _():
        o_ref[...] = acc_ref[...].astype(o_ref.dtype)


# ---------------------------------------------------------------------------
# wrapper
# ---------------------------------------------------------------------------
_DEF_RESIDENT_WEIGHT_BYTES = 8 * 1024 * 1024   # keep weight whole in VMEM below this
_VMEM_PLAN_BYTES = 40 * 1024 * 1024            # conservative plan (v7x: 64 MiB/TC)
_VMEM_LIMIT_BYTES = 48 * 1024 * 1024           # explicit scoped-VMEM limit


def linear_nd(x, weight, bias, *, cast_to_bf16=False,
              resident_weight_budget_bytes=_DEF_RESIDENT_WEIGHT_BYTES):
    """LinearND forward.

    x:      (..., in_features)
    weight: (out_features, in_features)   -- torch.nn.Linear convention
    bias:   (out_features,)
    returns (..., out_features)
    """
    in_features = x.shape[-1]
    out_features = weight.shape[0]
    assert weight.shape == (out_features, in_features)
    assert bias.shape == (out_features,)

    size = x.shape
    m = 1
    for s in size[:-1]:
        m *= int(s)
    out_shape = size[:-1] + (out_features,)
    out_dtype = x.dtype
    if m == 0:
        return jnp.zeros(out_shape, dtype=out_dtype)

    # MXU operand dtype (accumulation is always f32).
    op_dtype = jnp.bfloat16 if cast_to_bf16 else x.dtype
    op_bytes = jnp.dtype(op_dtype).itemsize
    out_bytes = jnp.dtype(out_dtype).itemsize
    sublane = 16 if op_bytes == 2 else 8       # bf16 packs 2 rows per sublane

    # ---- N: lane-dense output, tn up to 512, N padded to a multiple of tn --
    n_pad = _round_up(out_features, 128)
    tn = min(512, n_pad)
    n_pad = _round_up(n_pad, tn)

    # ---- K: keep whole when small, else pick tk from divisors (no x K-pad) -
    if in_features <= 1024:
        tk = in_features
        k_pad = in_features
    else:
        tk = None
        cand = 1024
        while cand >= 128:
            if in_features % cand == 0:
                tk = cand
                break
            cand -= 128
        if tk is None:
            tk = 512
        k_pad = _round_up(in_features, tk)

    m_pad8 = _round_up(m, sublane)

    # ---- resident-weight plan: weight DMA'd exactly once -------------------
    weight_bytes = in_features * n_pad * op_bytes
    use_resident = weight_bytes <= resident_weight_budget_bytes
    if use_resident:
        tm, m_pad = _pick_tm(m_pad8, sublane, cap=512, min_blocks=2)

        def _res_bytes(tm_):
            return (2 * in_features * n_pad * op_bytes    # weight buffers
                    + 2 * tm_ * in_features * op_bytes    # x tile buffers
                    + 2 * tm_ * n_pad * out_bytes         # output tile buffers
                    + 2 * n_pad * 4)                      # bias

        while tm > sublane and _res_bytes(tm) > _VMEM_PLAN_BYTES:
            tm = max(sublane, _round_up(tm // 2, sublane))
            m_pad = _round_up(m_pad8, tm)
        if _res_bytes(tm) > _VMEM_PLAN_BYTES:
            use_resident = False

    # ---- operands: pre-transposed weight -> native (K, N) RHS on the MXU ---
    x2d = x.reshape(m, in_features)
    w_t = weight.T                         # one-off layout fix, outside hot path
    b2d = bias.reshape(1, out_features)

    if cast_to_bf16:
        x2d = x2d.astype(jnp.bfloat16)
        w_t = w_t.astype(jnp.bfloat16)

    if n_pad != out_features:
        w_t = jnp.pad(w_t, ((0, 0), (0, n_pad - out_features)))
        b2d = jnp.pad(b2d, ((0, 0), (0, n_pad - out_features)))

    cost = pl.CostEstimate(
        flops=2 * m * in_features * out_features,
        transcendentals=0,
        bytes_accessed=(m * in_features * op_bytes
                        + in_features * out_features * op_bytes
                        + out_features * 4
                        + m * out_features * out_bytes))

    if use_resident:
        if m_pad != m:
            x2d = jnp.pad(x2d, ((0, m_pad - m), (0, 0)))   # only if needed
        grid = (m_pad // tm,)
        out2d = pl.pallas_call(
            _resident_kernel,
            out_shape=jax.ShapeDtypeStruct((m_pad, n_pad), out_dtype),
            grid_spec=pltpu.PrefetchScalarGridSpec(
                num_scalar_prefetch=0,
                grid=grid,
                in_specs=[
                    pl.BlockSpec((tm, in_features), lambda i: (i, 0)),   # x tile
                    pl.BlockSpec((in_features, n_pad), lambda i: (0, 0)),  # W^T, resident
                    pl.BlockSpec((1, n_pad), lambda i: (0, 0)),          # bias
                ],
                out_specs=pl.BlockSpec((tm, n_pad), lambda i: (i, 0)),
            ),
            compiler_params=pltpu.CompilerParams(
                dimension_semantics=("parallel",),
                vmem_limit_bytes=_VMEM_LIMIT_BYTES),
            cost_estimate=cost,
        )(x2d, w_t, b2d)
    else:
        # general M/N/K-tiled path for large weights
        tm, m_pad = _pick_tm(m_pad8, sublane, cap=512, min_blocks=1)
        if k_pad != in_features:
            w_t = jnp.pad(w_t, ((0, k_pad - in_features), (0, 0)))
        if (m_pad != m) or (k_pad != in_features):
            x2d = jnp.pad(x2d, ((0, m_pad - m), (0, k_pad - in_features)))

        grid = (m_pad // tm, n_pad // tn, k_pad // tk)
        inplace = jnp.dtype(out_dtype) == jnp.dtype(jnp.float32)
        kernel = _tiled_kernel_inplace if inplace else _tiled_kernel_scratch
        scratch = [] if inplace else [pltpu.VMEM((tm, tn), jnp.float32)]

        out2d = pl.pallas_call(
            kernel,
            out_shape=jax.ShapeDtypeStruct((m_pad, n_pad), out_dtype),
            grid_spec=pltpu.PrefetchScalarGridSpec(
                num_scalar_prefetch=0,
                grid=grid,
                in_specs=[
                    pl.BlockSpec((tm, tk), lambda i, j, k: (i, k)),   # x tile
                    pl.BlockSpec((tk, tn), lambda i, j, k: (k, j)),   # W^T tile
                    pl.BlockSpec((1, tn), lambda i, j, k: (0, j)),    # bias tile
                ],
                out_specs=pl.BlockSpec((tm, tn), lambda i, j, k: (i, j)),
                scratch_shapes=scratch,
            ),
            compiler_params=pltpu.CompilerParams(
                dimension_semantics=("parallel", "parallel", "arbitrary"),
                vmem_limit_bytes=_VMEM_LIMIT_BYTES),
            cost_estimate=cost,
        )(x2d, w_t, b2d)

    if (m_pad != m) or (n_pad != out_features):
        out2d = out2d[:m, :out_features]
    return out2d.reshape(out_shape)


# ---------------------------------------------------------------------------
# self-test
# ---------------------------------------------------------------------------
if __name__ == "__main__":
    key = jax.random.PRNGKey(0)

    def make_inputs(k, batch, seq, in_f, out_f):
        kx, kw, kb = jax.random.split(k, 3)
        x = jax.random.normal(kx, (batch, seq, in_f), dtype=jnp.float32)
        bound = 1.0 / math.sqrt(in_f)
        w = jax.random.uniform(kw, (out_f, in_f), minval=-bound, maxval=bound,
                               dtype=jnp.float32)
        b = jax.random.uniform(kb, (out_f,), minval=-bound, maxval=bound,
                               dtype=jnp.float32)
        return x, w, b

    k1, k2 = jax.random.split(key)

    # 1) exact f32 path (resident-weight kernel, 1-D grid over row tiles)
    x, w, b = make_inputs(k1, 2, 8, 32, 64)
    out = jax.block_until_ready(linear_nd(x, w, b))
    ref = (jnp.dot(x.reshape(-1, 32), w.T,
                   precision=lax.Precision.HIGHEST) + b).reshape(2, 8, 64)
    assert out.shape == (2, 8, 64)
    assert jnp.allclose(out, ref, atol=1e-5, rtol=1e-5)

    # 2) bf16 MXU operands, f32 accumulation (performance mode)
    out_bf16 = jax.block_until_ready(linear_nd(x, w, b, cast_to_bf16=True))
    assert jnp.allclose(out_bf16, ref, atol=5e-2, rtol=5e-2)

    # 3) tiled M/N/K path (forced via a zero resident budget) with K split
    x3, w3, b3 = make_inputs(k2, 2, 40, 2048, 384)
    out3 = jax.block_until_ready(
        linear_nd(x3, w3, b3, resident_weight_budget_bytes=0))
    ref3 = (jnp.dot(x3.reshape(-1, 2048), w3.T,
                    precision=lax.Precision.HIGHEST) + b3).reshape(2, 40, 384)
    assert out3.shape == (2, 40, 384)
    assert jnp.allclose(out3, ref3, atol=1e-4, rtol=1e-4)

    print("KERNEL_OK")
</pallas_src>

<mosaic_0001>
module attributes {stable_mosaic.version = 11 : i64} {
  func.func @_resident_kernel(%arg0: i32, %arg1: memref<8x32xf32, #tpu.memory_space<vmem>>, %arg2: memref<32x128xf32, #tpu.memory_space<vmem>>, %arg3: memref<1x128xf32, #tpu.memory_space<vmem>>, %arg4: memref<8x128xf32, #tpu.memory_space<vmem>>) attributes {dimension_semantics = [#tpu.dimension_semantics<parallel>], iteration_bounds = array<i64: 2>, scalar_prefetch = 0 : i64, scratch_operands = 0 : i64, tpu.core_type = #tpu.core_type<tc>, window_params = [{transform_indices = @transform_0, window_bounds = array<i64: 8, 32>}, {pipeline_mode = #tpu.pipeline_mode<synchronous>, transform_indices = @transform_1, window_bounds = array<i64: 32, 128>}, {pipeline_mode = #tpu.pipeline_mode<synchronous>, transform_indices = @transform_2, window_bounds = array<i64: 1, 128>}, {transform_indices = @transform_3, window_bounds = array<i64: 8, 128>}]} {
    %c0 = arith.constant 0 : index
    %c0_0 = arith.constant 0 : index
    %0 = vector.load %arg1[%c0, %c0_0] : memref<8x32xf32, #tpu.memory_space<vmem>>, vector<8x32xf32>
    %c0_1 = arith.constant 0 : index
    %c0_2 = arith.constant 0 : index
    %1 = vector.load %arg2[%c0_1, %c0_2] : memref<32x128xf32, #tpu.memory_space<vmem>>, vector<32x128xf32>
    %cst = arith.constant dense<0.000000e+00> : vector<8x128xf32>
    %2 = tpu.matmul %0, %1, %cst {dimension_numbers = #tpu.dot_dimension_numbers<[1], [0], [0], [1], [0, 0, 1, 1], [], []>} : vector<8x32xf32>, vector<32x128xf32>, vector<8x128xf32> -> vector<8x128xf32>
    %c0_3 = arith.constant 0 : index
    %c0_4 = arith.constant 0 : index
    %3 = vector.load %arg3[%c0_3, %c0_4] : memref<1x128xf32, #tpu.memory_space<vmem>>, vector<1x128xf32>
    %4 = vector.broadcast %3 : vector<1x128xf32> to vector<8x128xf32>
    %5 = arith.addf %2, %4 : vector<8x128xf32>
    %c0_5 = arith.constant 0 : index
    %c0_6 = arith.constant 0 : index
    %6 = vector.load %arg4[%c0_5, %c0_6] : memref<8x128xf32, #tpu.memory_space<vmem>>, vector<8x128xf32>
    tpu.vector_store %arg4[%c0_5, %c0_6], %5 {strides = array<i32>} : memref<8x128xf32, #tpu.memory_space<vmem>>, vector<8x128xf32>,
    return
  }
  func.func @transform_0(%arg0: i32) -> (i32, i32) {
    %c0_i32 = arith.constant 0 : i32
    %c0_i32_0 = arith.constant 0 : i32
    return %arg0, %c0_i32 : i32, i32
  }
  func.func @transform_1(%arg0: i32) -> (i32, i32) {
    %c0_i32 = arith.constant 0 : i32
    %c0_i32_0 = arith.constant 0 : i32
    %c0_i32_1 = arith.constant 0 : i32
    return %c0_i32, %c0_i32_0 : i32, i32
  }
  func.func @transform_2(%arg0: i32) -> (i32, i32) {
    %c0_i32 = arith.constant 0 : i32
    %c0_i32_0 = arith.constant 0 : i32
    %c0_i32_1 = arith.constant 0 : i32
    return %c0_i32, %c0_i32_0 : i32, i32
  }
  func.func @transform_3(%arg0: i32) -> (i32, i32) {
    %c0_i32 = arith.constant 0 : i32
    %c0_i32_0 = arith.constant 0 : i32
    return %arg0, %c0_i32 : i32, i32
  }
}

</mosaic_0001>

<llo_original>
// kernel: tpu_custom_call.1
$region0: #{tpu_custom_call.1}
  #allocation0 [shape = 'u32[]', space=smem, size = 0x4, offset = 0x4, fixed_abs, tag = 'smem constant byte address 0x4 - core index']
  #allocation1 [shape = 'u32[144,128]{1,0:T(1,128)}', space=vmem, size = 0x12000, scoped, tag = 'internal scratch']
  %s0 = inlined_call_operand.hbm [shape: f32[16,32], index: 0, kind: input, shape index: {}]
  %s1 = inlined_call_operand.hbm [shape: f32[32,128], index: 1, kind: input, shape index: {}]
  %s2 = inlined_call_operand.vmem [shape: f32[1,128], index: 2, kind: input, shape index: {}]
  %s3 = inlined_call_operand.hbm [shape: f32[16,128], index: 3, kind: output, shape index: {}]
  %s4 = sld [smem:[#allocation0]]
  $region53: #{tpu_custom_call.1} parent=0
    _
  %s6 = ssub.s32 1, %s4
  %s7 = scalar_select 0, %s6, %s4
  $region1: #{tpu_custom_call.1} parent=0
    #allocation2 [shape = 'u8[8192]{0}', space=vmem, size = 0x2000, scoped, tag = 'input window, operand 0']
    #allocation3 [shape = 's32[2]{0}', space=sflag, size = 0x8, scoped, tag = 'scoped memory for tpu_custom_call.1']
    #allocation4 [shape = 's32[2]{0}', space=sflag, size = 0x8, scoped, tag = 'scoped memory for tpu_custom_call.1']
    #allocation5 [shape = 'u8[16384]{0}', space=vmem, size = 0x4000, scoped, tag = 'input window, operand 1, single buffered']
    #allocation6 [shape = 's32[1]{0}', space=sflag, size = 0x4, scoped, tag = 'scoped memory for tpu_custom_call.1']
    #allocation7 [shape = 'u8[8192]{0}', space=vmem, size = 0x2000, scoped, tag = 'output window, operand 0']
    %8 = vsyncpa [#allocation3], 0
    %s9 = scalar_lea.sflag [#allocation3], 1
    %10 = vsyncpa %s9, 0
    %11 = vsyncpa [#allocation6], 0
    %12 = vsyncpa [#allocation4], 0
    %s13 = scalar_lea.sflag [#allocation4], 1
    %14 = vsyncpa %s13, 0
    loop: start=0, step=1, limit=4
    $region2: #{tpu_custom_call.1} parent=1 // loop_pre_header
      _
    $region3: #{tpu_custom_call.1} parent=1 // loop_header
      %s16 = sphi 0, %s20
      %p17 = scmp.ge.s32.totalorder %s16, 4
      %s26 = sphi 0, %s28
      %s29 = sphi 0, %s26
      %s30 = sphi 0, %s29
      %s46 = sphi 0, %s30
      %s50 = sphi 0, %s50
      %s52 = sphi 0, %s50
      %s53 = sphi 0, %s52
      %s67 = sphi 0, %s53
      %s71 = sphi 0, %s71
      %s73 = sphi 0, %s71
      %s74 = sphi 0, %s73
      %s88 = sphi 0, %s74
      %s94 = sphi 0, %s96
      %s97 = sphi 0, %s94
      %s98 = sphi 0, %s97
      %s114 = sphi 0, %s98
    $region4: #{tpu_custom_call.1} parent=1 // loop_header_branch
      %19 = sbr.rel (%p17) target = $region8
    $region5: #{tpu_custom_call.1} parent=1 // loop_body
      %s21 = ssub.s32 %s16, 1
      %s22 = ssub.s32 %s16, 2
      %s23 = sadd.s32 %s16, 1
      %s24 = ssub.s32 %s16, %s23
      %p25 = scmp.eq.s32.totalorder %s24, 0
      %s27 = sadd.s32 %s26, 1
      %s28 = scalar_select %p25, %s26, %s27
      %p31 = pneg %p25
      %p32 = scmp.eq.s32.totalorder %s16, 1
      %p33 = por %p31, %p32
      %p34 = scmp.ne.s32.totalorder %s26, %s29
      %p35 = scmp.eq.s32.totalorder %s16, 0
      %p36 = por %p34, %p35
      %p37 = scmp.ne.s32.totalorder %s26, %s29
      %p38 = scmp.eq.s32.totalorder %s21, 1
      %p39 = por %p37, %p38
      %p40 = scmp.ne.s32.totalorder %s29, %s30
      %p41 = scmp.eq.s32.totalorder %s21, 0
      %p42 = por %p40, %p41
      %p43 = scmp.ne.s32.totalorder %s29, %s30
      %p44 = scmp.eq.s32.totalorder %s22, 1
      %p45 = por %p43, %p44
      %p47 = scmp.ne.s32.totalorder %s30, %s46
      %p48 = scmp.eq.s32.totalorder %s22, 0
      %p49 = por %p47, %p48
      %s51 = sadd.s32 %s50, 1
      %p54 = scmp.eq.s32.totalorder %s16, 1
      %p55 = scmp.ne.s32.totalorder %s50, %s52
      %p56 = scmp.eq.s32.totalorder %s16, 0
      %p57 = por %p55, %p56
      %p58 = scmp.ne.s32.totalorder %s50, %s52
      %p59 = scmp.eq.s32.totalorder %s21, 1
      %p60 = por %p58, %p59
      %p61 = scmp.ne.s32.totalorder %s52, %s53
      %p62 = scmp.eq.s32.totalorder %s21, 0
      %p63 = por %p61, %p62
      %p64 = scmp.ne.s32.totalorder %s52, %s53
      %p65 = scmp.eq.s32.totalorder %s22, 1
      %p66 = por %p64, %p65
      %p68 = scmp.ne.s32.totalorder %s53, %s67
      %p69 = scmp.eq.s32.totalorder %s22, 0
      %p70 = por %p68, %p69
      %s72 = sadd.s32 %s71, 1
      %p75 = scmp.eq.s32.totalorder %s16, 1
      %p76 = scmp.ne.s32.totalorder %s71, %s73
      %p77 = scmp.eq.s32.totalorder %s16, 0
      %p78 = por %p76, %p77
      %p79 = scmp.ne.s32.totalorder %s71, %s73
      %p80 = scmp.eq.s32.totalorder %s21, 1
      %p81 = por %p79, %p80
      %p82 = scmp.ne.s32.totalorder %s73, %s74
      %p83 = scmp.eq.s32.totalorder %s21, 0
      %p84 = por %p82, %p83
      %p85 = scmp.ne.s32.totalorder %s73, %s74
      %p86 = scmp.eq.s32.totalorder %s22, 1
      %p87 = por %p85, %p86
      %p89 = scmp.ne.s32.totalorder %s74, %s88
      %p90 = scmp.eq.s32.totalorder %s22, 0
      %p91 = por %p89, %p90
      %s92 = ssub.s32 %s16, %s23
      %p93 = scmp.eq.s32.totalorder %s92, 0
      %s95 = sadd.s32 %s94, 1
      %s96 = scalar_select %p93, %s94, %s95
      %p99 = pneg %p93
      %p100 = scmp.eq.s32.totalorder %s16, 1
      %p101 = por %p99, %p100
      %p102 = scmp.ne.s32.totalorder %s94, %s97
      %p103 = scmp.eq.s32.totalorder %s16, 0
      %p104 = por %p102, %p103
      %p105 = scmp.ne.s32.totalorder %s94, %s97
      %p106 = scmp.eq.s32.totalorder %s21, 1
      %p107 = por %p105, %p106
      %p108 = scmp.ne.s32.totalorder %s97, %s98
      %p109 = scmp.eq.s32.totalorder %s21, 0
      %p110 = por %p108, %p109
      %p111 = scmp.ne.s32.totalorder %s97, %s98
      %p112 = scmp.eq.s32.totalorder %s22, 1
      %p113 = por %p111, %p112
      %p115 = scmp.ne.s32.totalorder %s98, %s114
      %p116 = scmp.eq.s32.totalorder %s22, 0
      %p117 = por %p115, %p116
      %p118 = scmp.le.s32.totalorder 1, %s16
      %p119 = scmp.lt.s32.totalorder %s16, 3
      %p120 = pnand %p118, %p119
      %p121 = pneg %p120
      // Predicated region
      $region9: #{tpu_custom_call.1} parent=5 // pred_check
        _
      $region10: #{tpu_custom_call.1} parent=5 // pred_check_branch
        %123 = sbr.rel (%p120) target = $region12
      $region11: #{tpu_custom_call.1} parent=5 // pred_region
        %s124 = ssub.s32 %s16, 1
        // Predicated region
        $region13: #{tpu_custom_call.1} parent=11 // pred_check
          %p125 = pneg %p63
        $region14: #{tpu_custom_call.1} parent=11 // pred_check_branch
          %127 = sbr.rel (%p125) target = $region16
        $region15: #{tpu_custom_call.1} parent=11 // pred_region
          %s129 = ssub.s32 512, 512
          %130 = vsyncadd [#allocation6], %s129
          %s131 = sshll.u32 [#allocation5], 4
          %s132 = int_to_ptr.vmem [resolvable:$true] %s131
          %137 = dma.hbm_to_vmem [thread:$0]  %s1, 512, %s132, [#allocation6], 128, 128, 8
        $region16: #{tpu_custom_call.1} parent=11 // pred_fallthru
          _
        // Predicated region
        $region17: #{tpu_custom_call.1} parent=11 // pred_check
          %p138 = pneg %p84
        $region18: #{tpu_custom_call.1} parent=11 // pred_check_branch
          %140 = sbr.rel (%p138) target = $region20
        $region19: #{tpu_custom_call.1} parent=11 // pred_region
          _
        $region20: #{tpu_custom_call.1} parent=11 // pred_fallthru
          _
      $region12: #{tpu_custom_call.1} parent=5 // pred_fallthru
        _
      %p141 = scmp.lt.s32.totalorder %s16, 2
      // Predicated region
      $region21: #{tpu_custom_call.1} parent=5 // pred_check
        %p142 = pneg %p141
      $region22: #{tpu_custom_call.1} parent=5 // pred_check_branch
        %144 = sbr.rel (%p142) target = $region24
      $region23: #{tpu_custom_call.1} parent=5 // pred_region
        // Predicated region
        $region25: #{tpu_custom_call.1} parent=23 // pred_check
          %p145 = pneg %p36
        $region26: #{tpu_custom_call.1} parent=23 // pred_check_branch
          %147 = sbr.rel (%p145) target = $region28
        $region27: #{tpu_custom_call.1} parent=23 // pred_region
          %s148 = sand.u32 %s26, 1
          %s149 = scalar_lea.sflag [#allocation3], %s148
          %s150 = sand.u32 %s26, 1
          %s151 = smul.addr %s150, 8
          %s152 = scalar_lea.vmem [#allocation2], %s151
          %s154 = ssub.s32 128, 128
          %155 = vsyncadd %s149, %s154
          %s156 = smul.addr %s16, 128
          %s157 = scalar_lea.hbm %s0, %s156
          %s159 = sshll.u32 %s152, 4
          %s160 = int_to_ptr.vmem [resolvable:$true] %s159
          %162 = dma.hbm_to_vmem [thread:$0]  %s157, 128, %s160, %s149
        $region28: #{tpu_custom_call.1} parent=23 // pred_fallthru
          _
      $region24: #{tpu_custom_call.1} parent=5 // pred_fallthru
        _
      %p163 = scmp.le.s32.totalorder 1, %s16
      %p164 = scmp.lt.s32.totalorder %s16, 3
      %p165 = pnand %p163, %p164
      %p166 = pneg %p165
      // Predicated region
      $region29: #{tpu_custom_call.1} parent=5 // pred_check
        _
      $region30: #{tpu_custom_call.1} parent=5 // pred_check_branch
        %168 = sbr.rel (%p165) target = $region32
      $region31: #{tpu_custom_call.1} parent=5 // pred_region
        %s169 = ssub.s32 %s16, 1
        %s170 = sand.u32 %s29, 1
        %s171 = scalar_lea.sflag [#allocation3], %s170
        %s172 = sand.u32 %s29, 1
        %s173 = smul.addr %s172, 8
        %s174 = scalar_lea.vmem [#allocation2], %s173
        // Predicated region
        $region33: #{tpu_custom_call.1} parent=31 // pred_check
          %p175 = pneg %p42
        $region34: #{tpu_custom_call.1} parent=31 // pred_check_branch
          %177 = sbr.rel (%p175) target = $region36
        $region35: #{tpu_custom_call.1} parent=31 // pred_region
          %178 = dma.done %s171, 128
        $region36: #{tpu_custom_call.1} parent=31 // pred_fallthru
          _
        // Predicated region
        $region37: #{tpu_custom_call.1} parent=31 // pred_check
          %p179 = pneg %p63
        $region38: #{tpu_custom_call.1} parent=31 // pred_check_branch
          %181 = sbr.rel (%p179) target = $region40
        $region39: #{tpu_custom_call.1} parent=31 // pred_region
          %182 = dma.done [#allocation6], 512
        $region40: #{tpu_custom_call.1} parent=31 // pred_fallthru
          _
        %s183 = sand.u32 %s29, 1
        %s184 = scalar_lea.sflag [#allocation3], %s183
        %s185 = sand.u32 %s29, 1
        %s186 = smul.addr %s185, 8
        %s187 = scalar_lea.vmem [#allocation2], %s186
        %p188 = pneg %p42
        %p189 = pneg %p39
        %p190 = pneg %p63
        %p191 = pneg %p60
        %p192 = pneg %p84
        %p193 = pneg %p81
        %p194 = pneg %p110
        %p195 = pneg %p107
        %s196 = sand.u32 %s97, 1
        %s197 = scalar_lea.sflag [#allocation4], %s196
        %s198 = sand.u32 %s97, 1
        %s199 = smul.addr %s198, 8
        %s200 = scalar_lea.vmem [#allocation7], %s199
        %v201 = vld [vmem:[%s174] sm:$0xff]
        %v202 = vld [vmem:[#allocation5] sm:$0xff]
        %v203 = vld [vmem:[#allocation5 + $0x8] sm:$0xff]
        %v204 = vld [vmem:[#allocation5 + $0x10] sm:$0xff]
        %v205 = vld [vmem:[#allocation5 + $0x18] sm:$0xff]
        %v206 = vld [vmem:[%s2] sm:$0x1]
        %v208 = vlaneseq
        %v209 = vshrl.u32 %v208, 7
        %v210 = vsub.s32 0, %v209
        %v211 = vrot.slane %v206, %v210
        %vm213 = vcmask 261120
        %v215 = vsel %vm213, %v201, 0
        %217 = vmatprep.subr.mxu0 0.0
        %218 = vmatpush1.msra.mxu0 %v202
        %219 = vmatprep.subr.mxu0 0.0
        %220 = vmatpush1.msra.mxu0 %v203
        %221 = vmatprep.subr.mxu0 0.0
        %222 = vmatpush1.msra.mxu0 %v204
        %223 = vmatprep.subr.mxu0 0.0
        %224 = vmatpush1.msra.mxu0 %v205
        %225 = vmatprep.subr.mxu0 0.0
        %226 = vmatpush1.msra.mxu0 0.0
        %227 = vmatprep.subr.mxu0 0.0
        %228 = vmatpush1.msra.mxu0 0.0
        %229 = vmatprep.subr.mxu0 0.0
        %230 = vmatpush1.msra.mxu0 0.0
        %231 = vmatprep.subr.mxu0 0.0
        %232 = vmatpush1.msra.mxu0 0.0
        %233 = vmatprep.subr.mxu0 0.0
        %234 = vmatpush1.msra.mxu0 0.0
        %235 = vmatprep.subr.mxu0 0.0
        %236 = vmatpush1.msra.mxu0 0.0
        %237 = vmatprep.subr.mxu0 0.0
        %238 = vmatpush1.msra.mxu0 0.0
        %239 = vmatprep.subr.mxu0 0.0
        %240 = vmatpush1.msra.mxu0 0.0
        %241 = vmatprep.subr.mxu0 0.0
        %242 = vmatpush1.msra.mxu0 0.0
        %243 = vmatprep.subr.mxu0 0.0
        %244 = vmatpush1.msra.mxu0 0.0
        %245 = vmatprep.subr.mxu0 0.0
        %246 = vmatpush1.msra.mxu0 0.0
        %247 = vmatprep.subr.mxu0 0.0
        %248 = vmatpush1.msra.mxu0 0.0
        %249 = vmatprep.subr.mxu0 0.0
        %250 = vmatpush1.msra.mxu0 0.0
        %251 = vmatprep.subr.mxu0 0.0
        %252 = vmatpush1.msra.mxu0 0.0
        %253 = vmatprep.subr.mxu0 0.0
        %254 = vmatpush1.msra.mxu0 0.0
        %255 = vmatprep.subr.mxu0 0.0
        %256 = vmatpush1.msra.mxu0 0.0
        %257 = vmatprep.subr.mxu0 0.0
        %258 = vmatpush1.msra.mxu0 0.0
        %259 = vmatprep.subr.mxu0 0.0
        %260 = vmatpush1.msra.mxu0 0.0
        %261 = vmatprep.subr.mxu0 0.0
        %262 = vmatpush1.msra.mxu0 0.0
        %263 = vmatprep.subr.mxu0 0.0
        %264 = vmatpush1.msra.mxu0 0.0
        %265 = vmatprep.subr.mxu0 0.0
        %266 = vmatpush1.msra.mxu0 0.0
        %267 = vmatprep.subr.mxu0 0.0
        %268 = vmatpush1.msra.mxu0 0.0
        %269 = vmatprep.subr.mxu0 0.0
        %270 = vmatpush1.msra.mxu0 0.0
        %271 = vmatprep.subr.mxu0 0.0
        %272 = vmatpush1.msra.mxu0 0.0
        %273 = vmatprep.subr.mxu0 0.0
        %274 = vmatpush1.msra.mxu0 0.0
        %275 = vmatprep.subr.mxu0 0.0
        %276 = vmatpush1.msra.mxu0 0.0
        %277 = vmatprep.subr.mxu0 0.0
        %278 = vmatpush1.msra.mxu0 0.0
        %279 = vmatprep.subr.mxu0 0.0
        %280 = vmatpush1.msra.mxu0 0.0
        %281 = vmatprep.mubr.f32.mxu0 0.0
        %282 = vmatmul.mubr.f32.gmra.mrb[0].mxu0 %v215
        %v283 = vpop.f32.mrb[0].mxu0
        %v284 = vadd.f32 %v211, %v283
        %v285 = vpop.f32.mrb[0].mxu0
        %286 = vdwg.mxu0
        %287 = vst [vmem:[%s200] sm:$0xff] %v284
        %s288 = sand.u32 %s97, 1
        %s289 = scalar_lea.sflag [#allocation4], %s288
        %s290 = sand.u32 %s97, 1
        %s291 = smul.addr %s290, 8
        %s292 = scalar_lea.vmem [#allocation7], %s291
        // Predicated region
        $region41: #{tpu_custom_call.1} parent=31 // pred_check
          %p293 = pneg %p107
        $region42: #{tpu_custom_call.1} parent=31 // pred_check_branch
          %295 = sbr.rel (%p293) target = $region44
        $region43: #{tpu_custom_call.1} parent=31 // pred_region
          %s297 = ssub.s32 128, 128
          %298 = vsyncadd %s289, %s297
          %s299 = smul.addr %s21, 128
          %s300 = scalar_lea.hbm %s3, %s299
          %s302 = sshll.u32 %s292, 4
          %s303 = int_to_ptr.vmem [resolvable:$true] %s302
          %305 = dma.vmem_to_hbm [thread:$0]  %s303, 128, %s300, %s289
        $region44: #{tpu_custom_call.1} parent=31 // pred_fallthru
          _
      $region32: #{tpu_custom_call.1} parent=5 // pred_fallthru
        _
      %p306 = scmp.le.s32.totalorder 2, %s16
      // Predicated region
      $region45: #{tpu_custom_call.1} parent=5 // pred_check
        %p307 = pneg %p306
      $region46: #{tpu_custom_call.1} parent=5 // pred_check_branch
        %309 = sbr.rel (%p307) target = $region48
      $region47: #{tpu_custom_call.1} parent=5 // pred_region
        %s310 = ssub.s32 %s16, 2
        // Predicated region
        $region49: #{tpu_custom_call.1} parent=47 // pred_check
          %p311 = pneg %p113
        $region50: #{tpu_custom_call.1} parent=47 // pred_check_branch
          %313 = sbr.rel (%p311) target = $region52
        $region51: #{tpu_custom_call.1} parent=47 // pred_region
          %s314 = sand.u32 %s98, 1
          %s315 = scalar_lea.sflag [#allocation4], %s314
          %s316 = sand.u32 %s98, 1
          %s317 = smul.addr %s316, 8
          %s318 = scalar_lea.vmem [#allocation7], %s317
          %319 = dma.done %s315, 128
        $region52: #{tpu_custom_call.1} parent=47 // pred_fallthru
          _
      $region48: #{tpu_custom_call.1} parent=5 // pred_fallthru
        _
    $region6: #{tpu_custom_call.1} parent=1 // loop_footer
      %s20 = sadd.s32 1, %s16
    $region7: #{tpu_custom_call.1} parent=1 // loop_footer_branch
      %15 = sbr.rel target = $region3
    $region8: #{tpu_custom_call.1} parent=1 // loop_exit
      _
    %320 = vsyncpa [#allocation3], 1
    %s321 = scalar_lea.sflag [#allocation3], 1
    %322 = vsyncpa %s321, 1
    %323 = vsyncpa [#allocation6], 1
    %324 = vsyncpa [#allocation4], 1
    %s325 = scalar_lea.sflag [#allocation4], 1
    %326 = vsyncpa %s325, 1

</llo_original>
